<compile_context>
chip_gen: v7x
topology: tpu7x:2x2x1
jax: 0.10.0
libtpu: 0.0.40
codegen_flags: <defaults>
</compile_context>

<pallas_src>
import math
import functools

import jax
import jax.numpy as jnp
from jax import lax
from jax.experimental import pallas as pl
from jax.experimental.pallas import tpu as pltpu


_LANE = 128
_SUBLANE = 8
_TARGET_BLOCK_BYTES = 2 << 20     # ~2 MiB output blocks: safe on v5e/v6e/v7x defaults
_MAX_RESIDENT_BYTES = 4 << 20     # embedding + PE tables must fit comfortably in VMEM


def _round_up(n: int, m: int) -> int:
    return ((n + m - 1) // m) * m


# --------------------------- PE table (matches PyTorch __init__) ------------------- #

def build_positional_encoding(d_model: int, max_tokens: int = 1000) -> jnp.ndarray:
    """Deterministic sinusoidal PE table, identical to the PyTorch module."""
    i = jnp.arange(max_tokens, dtype=jnp.float32).reshape(-1, 1)                 # (T, 1)
    div = jnp.power(10000.0,
                    jnp.arange(0, d_model, 2, dtype=jnp.float32) / d_model)      # (D/2,)
    X = i / div
    pe = jnp.zeros((max_tokens, d_model), dtype=jnp.float32)
    pe = pe.at[:, 0::2].set(jnp.sin(X))
    pe = pe.at[:, 1::2].set(jnp.cos(X))
    return pe


# ------------------------------------ kernels -------------------------------------- #

def _gather_scale_pe(tok_ref, pos_ref, emb_ref, pe_ref, *, scale, vocab, seq_len):
    """Embedding + PE row gather via exact one-hot matmuls on the (otherwise idle) MXU."""
    ids = tok_ref[...]                                       # (R, 1) int32
    pos = pos_ref[...]                                       # (R, 1) int32
    rows = ids.shape[0]
    one_hot_v = (ids == lax.broadcasted_iota(jnp.int32, (rows, vocab), 1)
                 ).astype(jnp.float32)                       # (R, V)
    one_hot_s = (pos == lax.broadcasted_iota(jnp.int32, (rows, seq_len), 1)
                 ).astype(jnp.float32)                       # (R, S)
    # HIGHEST precision keeps the f32 row-select exact (no bf16 truncation of the table).
    emb = jnp.dot(one_hot_v, emb_ref[...].astype(jnp.float32),
                  preferred_element_type=jnp.float32,
                  precision=lax.Precision.HIGHEST)           # (R, D)
    pe = jnp.dot(one_hot_s, pe_ref[...].astype(jnp.float32),
                 preferred_element_type=jnp.float32,
                 precision=lax.Precision.HIGHEST)            # (R, D)
    return emb * scale + pe                                  # f32


def _fused_eval_kernel(tok_ref, pos_ref, emb_ref, pe_ref, o_ref, *,
                       scale, vocab, seq_len):
    y = _gather_scale_pe(tok_ref, pos_ref, emb_ref, pe_ref,
                         scale=scale, vocab=vocab, seq_len=seq_len)
    o_ref[...] = y.astype(o_ref.dtype)


def _fused_train_prng_kernel(seed_ref, tok_ref, pos_ref, emb_ref, pe_ref, o_ref, *,
                             scale, vocab, seq_len, keep_prob):
    # Distinct PRNG stream per grid step; the caller must vary `seed` per training step.
    pltpu.prng_seed(seed_ref[0] + pl.program_id(0))
    y = _gather_scale_pe(tok_ref, pos_ref, emb_ref, pe_ref,
                         scale=scale, vocab=vocab, seq_len=seq_len)
    bits = pltpu.bitcast(pltpu.prng_random_bits(y.shape), jnp.uint32)
    # keep iff bits < keep_prob * 2^32 (threshold saturates at 2^32-1: negligible bias)
    threshold = jnp.uint32(min(int(round(keep_prob * 2.0 ** 32)), 2 ** 32 - 1))
    o_ref[...] = jnp.where(bits < threshold, y * (1.0 / keep_prob), 0.0).astype(o_ref.dtype)


def _fused_train_mask_kernel(tok_ref, pos_ref, emb_ref, pe_ref, mask_ref, o_ref, *,
                             scale, vocab, seq_len):
    # Portability fallback only: host-generated scale-mask (values are 0 or 1/keep_prob).
    y = _gather_scale_pe(tok_ref, pos_ref, emb_ref, pe_ref,
                         scale=scale, vocab=vocab, seq_len=seq_len)
    o_ref[...] = (y * mask_ref[...]).astype(o_ref.dtype)


# --------------------------------- tiling helpers ---------------------------------- #

def _pick_row_tile(n_rows: int, d_model: int) -> int:
    """Row tile: multiple of 8 (or the full extent), ~_TARGET_BLOCK_BYTES per output
    block, and >=2 blocks whenever possible so both v7x TensorCores get work."""
    lane_d = _round_up(d_model, _LANE)          # VMEM lane padding for narrow d_model
    rows = max(_SUBLANE, (_TARGET_BLOCK_BYTES // (lane_d * 4)) // _SUBLANE * _SUBLANE)
    if rows >= n_rows:
        if n_rows >= 2 * _SUBLANE:
            rows = _round_up((n_rows + 1) // 2, _SUBLANE)    # split for megacore
        else:
            rows = n_rows                                    # single full-extent block
    return int(rows)


def _vmem_limit_bytes(rows, d_model, vocab, seq_len, streamed_f32_blocks):
    """Explicit scoped-VMEM request sized for the actual live buffers (+ margin)."""
    lane_d = _round_up(d_model, _LANE)
    block = rows * lane_d * 4                   # one streamed (rows, D) f32 buffer
    idx_block = rows * _LANE * 4                # one (rows, 1) int32 buffer, lane-padded
    resident = (_round_up(vocab, _SUBLANE) + _round_up(seq_len, _SUBLANE)) * lane_d * 4
    need = 2 * (streamed_f32_blocks * block + 2 * idx_block) + 2 * resident
    need = 2 * need + (4 << 20)                 # margin for compiler-internal scratch
    return int(min(max(need, 16 << 20), 48 << 20))


# ------------------------------------ wrapper --------------------------------------- #

def decoder_embed_and_position(tokens, embedding_table, pe_table, *,
                               dropout_p: float = 0.1, training: bool = False,
                               seed: int = 0, rng_key=None, out_dtype=None,
                               use_tpu_prng: bool = True):
    """Fused Decoder front-end: dropout(embedding(tokens) * sqrt(d_model) + PE[:S]).

    tokens: (B, S) int ids; embedding_table: (V, D); pe_table: (max_tokens>=S, D).
    Output: (B, S, D) in `out_dtype` (defaults to the embedding-table dtype; pass
    jnp.bfloat16 to halve the HBM write of this memory-bound kernel).
    """
    B, S = tokens.shape
    V, D = embedding_table.shape
    if out_dtype is None:
        out_dtype = embedding_table.dtype
    scale = float(math.sqrt(D))

    pe = pe_table[:S, :]
    lane_d = _round_up(D, _LANE)
    if (_round_up(V, _SUBLANE) + _round_up(S, _SUBLANE)) * lane_d * 4 > _MAX_RESIDENT_BYTES:
        # TODO(synk): large-vocab / long-sequence variant (per-row DMA gather with
        # scalar-prefetched ids instead of a VMEM-resident one-hot matmul) not implemented.
        raise NotImplementedError("embedding/PE tables too large to keep VMEM-resident")

    N = B * S
    tok2 = tokens.reshape(N, 1).astype(jnp.int32)
    pos2 = jnp.broadcast_to(jnp.arange(S, dtype=jnp.int32)[None, :], (B, S)).reshape(N, 1)

    rows = _pick_row_tile(N, D)
    grid = (pl.cdiv(N, rows),)

    idx_spec = pl.BlockSpec((rows, 1), lambda i, *_: (i, 0))
    emb_spec = pl.BlockSpec((V, D), lambda i, *_: (0, 0))    # VMEM-resident
    pe_spec = pl.BlockSpec((S, D), lambda i, *_: (0, 0))     # VMEM-resident
    out_spec = pl.BlockSpec((rows, D), lambda i, *_: (i, 0))
    out_shape = jax.ShapeDtypeStruct((N, D), out_dtype)

    apply_dropout = training and dropout_p > 0.0
    streamed = 1 + (1 if (apply_dropout and not use_tpu_prng) else 0)
    cparams = pltpu.CompilerParams(
        dimension_semantics=("parallel",),
        vmem_limit_bytes=_vmem_limit_bytes(rows, D, V, S, streamed))

    if not apply_dropout:
        out2 = pl.pallas_call(
            functools.partial(_fused_eval_kernel, scale=scale, vocab=V, seq_len=S),
            out_shape=out_shape,
            grid_spec=pltpu.PrefetchScalarGridSpec(
                num_scalar_prefetch=0, grid=grid,
                in_specs=[idx_spec, idx_spec, emb_spec, pe_spec],
                out_specs=out_spec),
            compiler_params=cparams,
        )(tok2, pos2, embedding_table, pe)
    else:
        keep_prob = 1.0 - float(dropout_p)
        if use_tpu_prng:
            seed_arr = jnp.asarray([seed], dtype=jnp.int32)
            out2 = pl.pallas_call(
                functools.partial(_fused_train_prng_kernel, scale=scale, vocab=V,
                                  seq_len=S, keep_prob=keep_prob),
                out_shape=out_shape,
                grid_spec=pltpu.PrefetchScalarGridSpec(
                    num_scalar_prefetch=1, grid=grid,
                    in_specs=[idx_spec, idx_spec, emb_spec, pe_spec],
                    out_specs=out_spec),
                compiler_params=cparams,
            )(seed_arr, tok2, pos2, embedding_table, pe)
        else:
            if rng_key is None:
                rng_key = jax.random.PRNGKey(seed)
            inv_keep = jnp.float32(1.0 / keep_prob)
            mask = jnp.where(jax.random.bernoulli(rng_key, keep_prob, (N, D)),
                             inv_keep, jnp.float32(0.0))
            mask_spec = pl.BlockSpec((rows, D), lambda i, *_: (i, 0))
            out2 = pl.pallas_call(
                functools.partial(_fused_train_mask_kernel, scale=scale, vocab=V, seq_len=S),
                out_shape=out_shape,
                grid_spec=pltpu.PrefetchScalarGridSpec(
                    num_scalar_prefetch=0, grid=grid,
                    in_specs=[idx_spec, idx_spec, emb_spec, pe_spec, mask_spec],
                    out_specs=out_spec),
                compiler_params=cparams,
            )(tok2, pos2, embedding_table, pe, mask)

    return out2.reshape(B, S, D)   # metadata-only reshape, no extra HBM pass

# TODO(synk): the remaining Decoder stages (EncoderTransformerBlock stack: multi-head
# attention, AddNorm/LayerNorm, FFN, and the final vocab projection) are not kernelized
# here; the reference PyTorch for them is non-runnable (nn.Sequencial / n.ReLU /
# layer(x, state) bugs), so only the well-defined embedding+PE+dropout front-end is covered.


# -------------------------------------- main ---------------------------------------- #

if __name__ == "__main__":
    d_model, vocab_size, max_tokens = 32, 64, 1000
    batch, seq = 2, 8

    root = jax.random.PRNGKey(0)
    k_tok, k_emb, k_drop = jax.random.split(root, 3)

    tokens = jax.random.randint(k_tok, (batch, seq), 0, vocab_size, dtype=jnp.int32)
    emb_table = jax.random.normal(k_emb, (vocab_size, d_model), dtype=jnp.float32) * 0.02
    pe_table = build_positional_encoding(d_model, max_tokens)

    ref = emb_table[tokens] * math.sqrt(d_model) + pe_table[None, :seq, :]

    # --- eval mode: dropout is identity ----------------------------------------------
    out_eval = decoder_embed_and_position(tokens, emb_table, pe_table,
                                          dropout_p=0.1, training=False)
    out_eval = jax.block_until_ready(out_eval)
    assert out_eval.shape == (batch, seq, d_model)
    assert jnp.allclose(out_eval, ref, atol=1e-5, rtol=1e-5), "eval-path mismatch"

    # --- training mode: in-kernel inverted dropout (TPU HW PRNG, portable fallback) ---
    keep_prob = 0.9
    try:
        out_tr = decoder_embed_and_position(tokens, emb_table, pe_table,
                                            dropout_p=1.0 - keep_prob, training=True,
                                            seed=2024)
        out_tr = jax.block_until_ready(out_tr)
    except Exception:
        out_tr = decoder_embed_and_position(tokens, emb_table, pe_table,
                                            dropout_p=1.0 - keep_prob, training=True,
                                            rng_key=k_drop, use_tpu_prng=False)
        out_tr = jax.block_until_ready(out_tr)
    assert out_tr.shape == (batch, seq, d_model)
    scaled_ref = ref / keep_prob
    ok = jnp.isclose(out_tr, 0.0, atol=1e-6) | jnp.isclose(out_tr, scaled_ref,
                                                           atol=1e-4, rtol=1e-4)
    assert bool(jnp.all(ok)), "training values are neither dropped nor inverted-scaled"
    n_zero = int(jnp.sum(jnp.isclose(out_tr, 0.0, atol=1e-6)))
    assert 0 < n_zero < out_tr.size, "dropout mask looks degenerate"

    print("KERNEL_OK")
</pallas_src>

<mosaic_0001>
module attributes {stable_mosaic.version = 11 : i64} {
  func.func @_fused_eval_kernel(%arg0: i32, %arg1: memref<8x1xi32, #tpu.memory_space<vmem>>, %arg2: memref<8x1xi32, #tpu.memory_space<vmem>>, %arg3: memref<64x32xf32, #tpu.memory_space<vmem>>, %arg4: memref<8x32xf32, #tpu.memory_space<vmem>>, %arg5: memref<8x32xf32, #tpu.memory_space<vmem>>) attributes {dimension_semantics = [#tpu.dimension_semantics<parallel>], iteration_bounds = array<i64: 2>, scalar_prefetch = 0 : i64, scratch_operands = 0 : i64, tpu.core_type = #tpu.core_type<tc>, window_params = [{transform_indices = @transform_0, window_bounds = array<i64: 8, 1>}, {transform_indices = @transform_1, window_bounds = array<i64: 8, 1>}, {pipeline_mode = #tpu.pipeline_mode<synchronous>, transform_indices = @transform_2, window_bounds = array<i64: 64, 32>}, {pipeline_mode = #tpu.pipeline_mode<synchronous>, transform_indices = @transform_3, window_bounds = array<i64: 8, 32>}, {transform_indices = @transform_4, window_bounds = array<i64: 8, 32>}]} {
    %c0 = arith.constant 0 : index
    %c0_0 = arith.constant 0 : index
    %0 = vector.load %arg1[%c0, %c0_0] : memref<8x1xi32, #tpu.memory_space<vmem>>, vector<8x1xi32>
    %c0_1 = arith.constant 0 : index
    %c0_2 = arith.constant 0 : index
    %1 = vector.load %arg2[%c0_1, %c0_2] : memref<8x1xi32, #tpu.memory_space<vmem>>, vector<8x1xi32>
    %2 = tpu.iota {dimensions = array<i32: 1>} : vector<8x64xi32>
    %3 = vector.broadcast %0 : vector<8x1xi32> to vector<8x64xi32>
    %4 = arith.cmpi eq, %3, %2 : vector<8x64xi32>
    %5 = arith.extui %4 : vector<8x64xi1> to vector<8x64xi32>
    %6 = arith.sitofp %5 : vector<8x64xi32> to vector<8x64xf32>
    %7 = tpu.iota {dimensions = array<i32: 1>} : vector<8x8xi32>
    %8 = vector.broadcast %1 : vector<8x1xi32> to vector<8x8xi32>
    %9 = arith.cmpi eq, %8, %7 : vector<8x8xi32>
    %10 = arith.extui %9 : vector<8x8xi1> to vector<8x8xi32>
    %11 = arith.sitofp %10 : vector<8x8xi32> to vector<8x8xf32>
    %c0_3 = arith.constant 0 : index
    %c0_4 = arith.constant 0 : index
    %12 = vector.load %arg3[%c0_3, %c0_4] : memref<64x32xf32, #tpu.memory_space<vmem>>, vector<64x32xf32>
    %cst = arith.constant dense<0.000000e+00> : vector<8x32xf32>
    %13 = tpu.matmul %6, %12, %cst {dimension_numbers = #tpu.dot_dimension_numbers<[1], [0], [0], [1], [0, 0, 1, 1], [], []>, precision = #tpu.contract_precision<fp32>} : vector<8x64xf32>, vector<64x32xf32>, vector<8x32xf32> -> vector<8x32xf32>
    %c0_5 = arith.constant 0 : index
    %c0_6 = arith.constant 0 : index
    %14 = vector.load %arg4[%c0_5, %c0_6] : memref<8x32xf32, #tpu.memory_space<vmem>>, vector<8x32xf32>
    %cst_7 = arith.constant dense<0.000000e+00> : vector<8x32xf32>
    %15 = tpu.matmul %11, %14, %cst_7 {dimension_numbers = #tpu.dot_dimension_numbers<[1], [0], [0], [1], [0, 0, 1, 1], [], []>, precision = #tpu.contract_precision<fp32>} : vector<8x8xf32>, vector<8x32xf32>, vector<8x32xf32> -> vector<8x32xf32>
    %cst_8 = arith.constant 5.65685415 : f32
    %16 = vector.broadcast %cst_8 : f32 to vector<8x32xf32>
    %17 = arith.mulf %13, %16 : vector<8x32xf32>
    %18 = arith.addf %17, %15 : vector<8x32xf32>
    %c0_9 = arith.constant 0 : index
    %c0_10 = arith.constant 0 : index
    %19 = vector.load %arg5[%c0_9, %c0_10] : memref<8x32xf32, #tpu.memory_space<vmem>>, vector<8x32xf32>
    tpu.vector_store %arg5[%c0_9, %c0_10], %18 {strides = array<i32>} : memref<8x32xf32, #tpu.memory_space<vmem>>, vector<8x32xf32>,
    return
  }
  func.func @transform_0(%arg0: i32) -> (i32, i32) {
    %c0_i32 = arith.constant 0 : i32
    %c0_i32_0 = arith.constant 0 : i32
    return %arg0, %c0_i32 : i32, i32
  }
  func.func @transform_1(%arg0: i32) -> (i32, i32) {
    %c0_i32 = arith.constant 0 : i32
    %c0_i32_0 = arith.constant 0 : i32
    return %arg0, %c0_i32 : i32, i32
  }
  func.func @transform_2(%arg0: i32) -> (i32, i32) {
    %c0_i32 = arith.constant 0 : i32
    %c0_i32_0 = arith.constant 0 : i32
    %c0_i32_1 = arith.constant 0 : i32
    return %c0_i32, %c0_i32_0 : i32, i32
  }
  func.func @transform_3(%arg0: i32) -> (i32, i32) {
    %c0_i32 = arith.constant 0 : i32
    %c0_i32_0 = arith.constant 0 : i32
    %c0_i32_1 = arith.constant 0 : i32
    return %c0_i32, %c0_i32_0 : i32, i32
  }
  func.func @transform_4(%arg0: i32) -> (i32, i32) {
    %c0_i32 = arith.constant 0 : i32
    %c0_i32_0 = arith.constant 0 : i32
    return %arg0, %c0_i32 : i32, i32
  }
}

</mosaic_0001>

<llo_original>
// kernel: tpu_custom_call.1
$region0: #{tpu_custom_call.1}
  #allocation0 [shape = 'u32[]', space=smem, size = 0x4, offset = 0x4, fixed_abs, tag = 'smem constant byte address 0x4 - core index']
  #allocation1 [shape = 'u32[144,128]{1,0:T(1,128)}', space=vmem, size = 0x12000, scoped, tag = 'internal scratch']
  %s0 = inlined_call_operand.vmem [shape: s32[16,1], index: 0, kind: input, shape index: {}]
  %s1 = inlined_call_operand.vmem [shape: s32[16,1], index: 1, kind: input, shape index: {}]
  %s2 = inlined_call_operand.vmem [shape: f32[64,32], index: 2, kind: input, shape index: {}]
  %s3 = inlined_call_operand.vmem [shape: f32[8,32], index: 3, kind: input, shape index: {}]
  %s4 = inlined_call_operand.hbm [shape: f32[16,32], index: 4, kind: output, shape index: {}]
  %s5 = sld [smem:[#allocation0]]
  $region49: #{tpu_custom_call.1} parent=0
    _
  %s7 = ssub.s32 1, %s5
  %s8 = scalar_select 0, %s7, %s5
  $region1: #{tpu_custom_call.1} parent=0
    #allocation2 [shape = 'u8[8192]{0}', space=vmem, size = 0x2000, scoped, tag = 'output window, operand 0']
    #allocation3 [shape = 's32[2]{0}', space=sflag, size = 0x8, scoped, tag = 'scoped memory for tpu_custom_call.1']
    %9 = vsyncpa [#allocation3], 0
    %s10 = scalar_lea.sflag [#allocation3], 1
    %11 = vsyncpa %s10, 0
    loop: start=0, step=1, limit=4
    $region2: #{tpu_custom_call.1} parent=1 // loop_pre_header
      _
    $region3: #{tpu_custom_call.1} parent=1 // loop_header
      %s13 = sphi 0, %s17
      %p14 = scmp.ge.s32.totalorder %s13, 4
      %s23 = sphi 0, %s25
      %s26 = sphi 0, %s23
      %s27 = sphi 0, %s26
      %s43 = sphi 0, %s27
      %s49 = sphi 0, %s51
      %s52 = sphi 0, %s49
      %s53 = sphi 0, %s52
      %s69 = sphi 0, %s53
      %s73 = sphi 0, %s73
      %s75 = sphi 0, %s73
      %s76 = sphi 0, %s75
      %s90 = sphi 0, %s76
      %s94 = sphi 0, %s94
      %s96 = sphi 0, %s94
      %s97 = sphi 0, %s96
      %s111 = sphi 0, %s97
      %s117 = sphi 0, %s119
      %s120 = sphi 0, %s117
      %s121 = sphi 0, %s120
      %s137 = sphi 0, %s121
    $region4: #{tpu_custom_call.1} parent=1 // loop_header_branch
      %16 = sbr.rel (%p14) target = $region8
    $region5: #{tpu_custom_call.1} parent=1 // loop_body
      %s18 = ssub.s32 %s13, 1
      %s19 = ssub.s32 %s13, 2
      %s20 = sadd.s32 %s13, 1
      %s21 = ssub.s32 %s13, %s20
      %p22 = scmp.eq.s32.totalorder %s21, 0
      %s24 = sadd.s32 %s23, 1
      %s25 = scalar_select %p22, %s23, %s24
      %p28 = pneg %p22
      %p29 = scmp.eq.s32.totalorder %s13, 1
      %p30 = por %p28, %p29
      %p31 = scmp.ne.s32.totalorder %s23, %s26
      %p32 = scmp.eq.s32.totalorder %s13, 0
      %p33 = por %p31, %p32
      %p34 = scmp.ne.s32.totalorder %s23, %s26
      %p35 = scmp.eq.s32.totalorder %s18, 1
      %p36 = por %p34, %p35
      %p37 = scmp.ne.s32.totalorder %s26, %s27
      %p38 = scmp.eq.s32.totalorder %s18, 0
      %p39 = por %p37, %p38
      %p40 = scmp.ne.s32.totalorder %s26, %s27
      %p41 = scmp.eq.s32.totalorder %s19, 1
      %p42 = por %p40, %p41
      %p44 = scmp.ne.s32.totalorder %s27, %s43
      %p45 = scmp.eq.s32.totalorder %s19, 0
      %p46 = por %p44, %p45
      %s47 = ssub.s32 %s13, %s20
      %p48 = scmp.eq.s32.totalorder %s47, 0
      %s50 = sadd.s32 %s49, 1
      %s51 = scalar_select %p48, %s49, %s50
      %p54 = pneg %p48
      %p55 = scmp.eq.s32.totalorder %s13, 1
      %p56 = por %p54, %p55
      %p57 = scmp.ne.s32.totalorder %s49, %s52
      %p58 = scmp.eq.s32.totalorder %s13, 0
      %p59 = por %p57, %p58
      %p60 = scmp.ne.s32.totalorder %s49, %s52
      %p61 = scmp.eq.s32.totalorder %s18, 1
      %p62 = por %p60, %p61
      %p63 = scmp.ne.s32.totalorder %s52, %s53
      %p64 = scmp.eq.s32.totalorder %s18, 0
      %p65 = por %p63, %p64
      %p66 = scmp.ne.s32.totalorder %s52, %s53
      %p67 = scmp.eq.s32.totalorder %s19, 1
      %p68 = por %p66, %p67
      %p70 = scmp.ne.s32.totalorder %s53, %s69
      %p71 = scmp.eq.s32.totalorder %s19, 0
      %p72 = por %p70, %p71
      %s74 = sadd.s32 %s73, 1
      %p77 = scmp.eq.s32.totalorder %s13, 1
      %p78 = scmp.ne.s32.totalorder %s73, %s75
      %p79 = scmp.eq.s32.totalorder %s13, 0
      %p80 = por %p78, %p79
      %p81 = scmp.ne.s32.totalorder %s73, %s75
      %p82 = scmp.eq.s32.totalorder %s18, 1
      %p83 = por %p81, %p82
      %p84 = scmp.ne.s32.totalorder %s75, %s76
      %p85 = scmp.eq.s32.totalorder %s18, 0
      %p86 = por %p84, %p85
      %p87 = scmp.ne.s32.totalorder %s75, %s76
      %p88 = scmp.eq.s32.totalorder %s19, 1
      %p89 = por %p87, %p88
      %p91 = scmp.ne.s32.totalorder %s76, %s90
      %p92 = scmp.eq.s32.totalorder %s19, 0
      %p93 = por %p91, %p92
      %s95 = sadd.s32 %s94, 1
      %p98 = scmp.eq.s32.totalorder %s13, 1
      %p99 = scmp.ne.s32.totalorder %s94, %s96
      %p100 = scmp.eq.s32.totalorder %s13, 0
      %p101 = por %p99, %p100
      %p102 = scmp.ne.s32.totalorder %s94, %s96
      %p103 = scmp.eq.s32.totalorder %s18, 1
      %p104 = por %p102, %p103
      %p105 = scmp.ne.s32.totalorder %s96, %s97
      %p106 = scmp.eq.s32.totalorder %s18, 0
      %p107 = por %p105, %p106
      %p108 = scmp.ne.s32.totalorder %s96, %s97
      %p109 = scmp.eq.s32.totalorder %s19, 1
      %p110 = por %p108, %p109
      %p112 = scmp.ne.s32.totalorder %s97, %s111
      %p113 = scmp.eq.s32.totalorder %s19, 0
      %p114 = por %p112, %p113
      %s115 = ssub.s32 %s13, %s20
      %p116 = scmp.eq.s32.totalorder %s115, 0
      %s118 = sadd.s32 %s117, 1
      %s119 = scalar_select %p116, %s117, %s118
      %p122 = pneg %p116
      %p123 = scmp.eq.s32.totalorder %s13, 1
      %p124 = por %p122, %p123
      %p125 = scmp.ne.s32.totalorder %s117, %s120
      %p126 = scmp.eq.s32.totalorder %s13, 0
      %p127 = por %p125, %p126
      %p128 = scmp.ne.s32.totalorder %s117, %s120
      %p129 = scmp.eq.s32.totalorder %s18, 1
      %p130 = por %p128, %p129
      %p131 = scmp.ne.s32.totalorder %s120, %s121
      %p132 = scmp.eq.s32.totalorder %s18, 0
      %p133 = por %p131, %p132
      %p134 = scmp.ne.s32.totalorder %s120, %s121
      %p135 = scmp.eq.s32.totalorder %s19, 1
      %p136 = por %p134, %p135
      %p138 = scmp.ne.s32.totalorder %s121, %s137
      %p139 = scmp.eq.s32.totalorder %s19, 0
      %p140 = por %p138, %p139
      %p141 = scmp.le.s32.totalorder 1, %s13
      %p142 = scmp.lt.s32.totalorder %s13, 3
      %p143 = pnand %p141, %p142
      %p144 = pneg %p143
      // Predicated region
      $region9: #{tpu_custom_call.1} parent=5 // pred_check
        _
      $region10: #{tpu_custom_call.1} parent=5 // pred_check_branch
        %146 = sbr.rel (%p143) target = $region12
      $region11: #{tpu_custom_call.1} parent=5 // pred_region
        %s147 = ssub.s32 %s13, 1
        // Predicated region
        $region13: #{tpu_custom_call.1} parent=11 // pred_check
          %p148 = pneg %p86
        $region14: #{tpu_custom_call.1} parent=11 // pred_check_branch
          %150 = sbr.rel (%p148) target = $region16
        $region15: #{tpu_custom_call.1} parent=11 // pred_region
          _
        $region16: #{tpu_custom_call.1} parent=11 // pred_fallthru
          _
        // Predicated region
        $region17: #{tpu_custom_call.1} parent=11 // pred_check
          %p151 = pneg %p107
        $region18: #{tpu_custom_call.1} parent=11 // pred_check_branch
          %153 = sbr.rel (%p151) target = $region20
        $region19: #{tpu_custom_call.1} parent=11 // pred_region
          _
        $region20: #{tpu_custom_call.1} parent=11 // pred_fallthru
          _
      $region12: #{tpu_custom_call.1} parent=5 // pred_fallthru
        _
      %p154 = scmp.lt.s32.totalorder %s13, 2
      // Predicated region
      $region21: #{tpu_custom_call.1} parent=5 // pred_check
        %p155 = pneg %p154
      $region22: #{tpu_custom_call.1} parent=5 // pred_check_branch
        %157 = sbr.rel (%p155) target = $region24
      $region23: #{tpu_custom_call.1} parent=5 // pred_region
        // Predicated region
        $region25: #{tpu_custom_call.1} parent=23 // pred_check
          %p158 = pneg %p33
        $region26: #{tpu_custom_call.1} parent=23 // pred_check_branch
          %160 = sbr.rel (%p158) target = $region28
        $region27: #{tpu_custom_call.1} parent=23 // pred_region
          %p161 = scmp.lt.s32.totalorder %s13, 1
          %s162 = scalar_select %p161, %s13, 1
          %s163 = smul.addr %s162, 8
          %s164 = scalar_lea.vmem %s0, %s163
        $region28: #{tpu_custom_call.1} parent=23 // pred_fallthru
          _
        // Predicated region
        $region29: #{tpu_custom_call.1} parent=23 // pred_check
          %p165 = pneg %p59
        $region30: #{tpu_custom_call.1} parent=23 // pred_check_branch
          %167 = sbr.rel (%p165) target = $region32
        $region31: #{tpu_custom_call.1} parent=23 // pred_region
          %p168 = scmp.lt.s32.totalorder %s13, 1
          %s169 = scalar_select %p168, %s13, 1
          %s170 = smul.addr %s169, 8
          %s171 = scalar_lea.vmem %s1, %s170
        $region32: #{tpu_custom_call.1} parent=23 // pred_fallthru
          _
      $region24: #{tpu_custom_call.1} parent=5 // pred_fallthru
        _
      %p172 = scmp.le.s32.totalorder 1, %s13
      %p173 = scmp.lt.s32.totalorder %s13, 3
      %p174 = pnand %p172, %p173
      %p175 = pneg %p174
      // Predicated region
      $region33: #{tpu_custom_call.1} parent=5 // pred_check
        _
      $region34: #{tpu_custom_call.1} parent=5 // pred_check_branch
        %177 = sbr.rel (%p174) target = $region36
      $region35: #{tpu_custom_call.1} parent=5 // pred_region
        %s178 = ssub.s32 %s13, 1
        %p179 = scmp.lt.s32.totalorder %s18, 1
        %s180 = scalar_select %p179, %s18, 1
        %s181 = smul.addr %s180, 8
        %s182 = scalar_lea.vmem %s0, %s181
        %p183 = pneg %p39
        %p184 = pneg %p36
        %p185 = scmp.lt.s32.totalorder %s18, 1
        %s186 = scalar_select %p185, %s18, 1
        %s187 = smul.addr %s186, 8
        %s188 = scalar_lea.vmem %s1, %s187
        %p189 = pneg %p65
        %p190 = pneg %p62
        %p191 = pneg %p86
        %p192 = pneg %p83
        %p193 = pneg %p107
        %p194 = pneg %p104
        %p195 = pneg %p133
        %p196 = pneg %p130
        %s197 = sand.u32 %s120, 1
        %s198 = scalar_lea.sflag [#allocation3], %s197
        %s199 = sand.u32 %s120, 1
        %s200 = smul.addr %s199, 8
        %s201 = scalar_lea.vmem [#allocation2], %s200
        %p202 = scmp.lt.s32.totalorder %s18, 1
        %s203 = scalar_select %p202, %s18, 1
        %s204 = smul.addr %s203, 8
        %s205 = scalar_lea.vmem %s0, %s204
        %p206 = scmp.lt.s32.totalorder %s18, 1
        %s207 = scalar_select %p206, %s18, 1
        %s208 = smul.addr %s207, 8
        %s209 = scalar_lea.vmem %s1, %s208
        %v210 = vld [vmem:[%s205] sm:$0xff]
        %v211 = vld [vmem:[%s209] sm:$0xff]
        %v212 = vlaneseq
        %v213 = vand.u32 %v212, 127
        %214 = vset.pattern.permute.xlu0 0
        %215 = vperm.xlu0 %214, %v210
        %v216 = vpop.permute.xlu0 %215
        %vm217 = vcmp.eq.s32.totalorder %v216, %v213
        %v218 = vsel %vm217, 1, 0
        %v219 = vcvt.s32.f32 %v218
        %220 = vset.pattern.permute.xlu0 0
        %221 = vperm.xlu0 %220, %v211
        %v222 = vpop.permute.xlu0 %221
        %vm223 = vcmp.eq.s32.totalorder %v222, %v213
        %v224 = vsel %vm223, 1, 0
        %v225 = vcvt.s32.f32 %v224
        %v226 = vld [vmem:[%s2] sm:$0xff]
        %v227 = vld [vmem:[%s2 + $0x8] sm:$0xff]
        %v228 = vld [vmem:[%s2 + $0x10] sm:$0xff]
        %v229 = vld [vmem:[%s2 + $0x18] sm:$0xff]
        %v230 = vld [vmem:[%s2 + $0x20] sm:$0xff]
        %v231 = vld [vmem:[%s2 + $0x28] sm:$0xff]
        %v232 = vld [vmem:[%s2 + $0x30] sm:$0xff]
        %v233 = vld [vmem:[%s2 + $0x38] sm:$0xff]
        %vm234 = vcmask 523264
        %v236 = vsel %vm234, %v219, 0
        %238 = vmatprep.subr.mxu0 0.0
        %v239 = vand.u32 %v226, 4294901760
        %240 = vmatpush1.msra.mxu0 %v239
        %241 = vmatprep.subr.mxu0 0.0
        %v242 = vand.u32 %v227, 4294901760
        %243 = vmatpush1.msra.mxu0 %v242
        %244 = vmatprep.subr.mxu0 0.0
        %v245 = vand.u32 %v228, 4294901760
        %246 = vmatpush1.msra.mxu0 %v245
        %247 = vmatprep.subr.mxu0 0.0
        %v248 = vand.u32 %v229, 4294901760
        %249 = vmatpush1.msra.mxu0 %v248
        %250 = vmatprep.subr.mxu0 0.0
        %v251 = vand.u32 %v230, 4294901760
        %252 = vmatpush1.msra.mxu0 %v251
        %253 = vmatprep.subr.mxu0 0.0
        %v254 = vand.u32 %v231, 4294901760
        %255 = vmatpush1.msra.mxu0 %v254
        %256 = vmatprep.subr.mxu0 0.0
        %v257 = vand.u32 %v232, 4294901760
        %258 = vmatpush1.msra.mxu0 %v257
        %259 = vmatprep.subr.mxu0 0.0
        %v260 = vand.u32 %v233, 4294901760
        %261 = vmatpush1.msra.mxu0 %v260
        %262 = vmatprep.subr.mxu0 0.0
        %263 = vmatpush1.msra.mxu0 0.0
        %264 = vmatprep.subr.mxu0 0.0
        %265 = vmatpush1.msra.mxu0 0.0
        %266 = vmatprep.subr.mxu0 0.0
        %267 = vmatpush1.msra.mxu0 0.0
        %268 = vmatprep.subr.mxu0 0.0
        %269 = vmatpush1.msra.mxu0 0.0
        %270 = vmatprep.subr.mxu0 0.0
        %271 = vmatpush1.msra.mxu0 0.0
        %272 = vmatprep.subr.mxu0 0.0
        %273 = vmatpush1.msra.mxu0 0.0
        %274 = vmatprep.subr.mxu0 0.0
        %275 = vmatpush1.msra.mxu0 0.0
        %276 = vmatprep.subr.mxu0 0.0
        %277 = vmatpush1.msra.mxu0 0.0
        %278 = vmatprep.subr.mxu0 0.0
        %279 = vmatpush1.msra.mxu0 0.0
        %280 = vmatprep.subr.mxu0 0.0
        %281 = vmatpush1.msra.mxu0 0.0
        %282 = vmatprep.subr.mxu0 0.0
        %283 = vmatpush1.msra.mxu0 0.0
        %284 = vmatprep.subr.mxu0 0.0
        %285 = vmatpush1.msra.mxu0 0.0
        %286 = vmatprep.subr.mxu0 0.0
        %287 = vmatpush1.msra.mxu0 0.0
        %288 = vmatprep.subr.mxu0 0.0
        %289 = vmatpush1.msra.mxu0 0.0
        %290 = vmatprep.subr.mxu0 0.0
        %291 = vmatpush1.msra.mxu0 0.0
        %292 = vmatprep.subr.mxu0 0.0
        %293 = vmatpush1.msra.mxu0 0.0
        %294 = vmatprep.subr.mxu0 0.0
        %295 = vmatpush1.msra.mxu0 0.0
        %296 = vmatprep.subr.mxu0 0.0
        %297 = vmatpush1.msra.mxu0 0.0
        %298 = vmatprep.subr.mxu0 0.0
        %299 = vmatpush1.msra.mxu0 0.0
        %300 = vmatprep.subr.mxu0 0.0
        %301 = vmatpush1.msra.mxu0 0.0
        %302 = vmatprep.subr.mxu0 0.0
        %303 = vmatpush1.msra.mxu0 0.0
        %304 = vmatprep.subr.mxu0 0.0
        %305 = vmatpush1.msra.mxu0 0.0
        %306 = vmatprep.subr.mxu0 0.0
        %307 = vmatpush1.msra.mxu0 0.0
        %308 = vmatprep.subr.mxu0 0.0
        %309 = vmatpush1.msra.mxu0 0.0
        %310 = vmatprep.mubr.f32.mxu0 0.0
        %v311 = vand.u32 %v236, 4294901760
        %v312 = vsub.f32 %v236, %v311
        %v313 = vand.u32 %v312, 4294901760
        %v314 = vsub.f32 %v312, %v313
        %v315 = vand.u32 %v314, 4294901760
        %316 = vmatmul.mubr.f32.gmra.mrb[0].mxu0 %v315
        %v317 = vpop.f32.mrb[0].mxu0
        %v318 = vadd.f32 0.0, %v317
        %v319 = vpop.f32.mrb[0].mxu0
        %320 = vdwg.mxu0
        %321 = vmatprep.subr.mxu0 0.0
        %v322 = vand.u32 %v226, 4294901760
        %v323 = vsub.f32 %v226, %v322
        %v324 = vand.u32 %v323, 4294901760
        %v325 = vsub.f32 %v323, %v324
        %v326 = vand.u32 %v325, 4294901760
        %327 = vmatpush1.msra.mxu0 %v326
        %328 = vmatprep.subr.mxu0 0.0
        %v329 = vand.u32 %v227, 4294901760
        %v330 = vsub.f32 %v227, %v329
        %v331 = vand.u32 %v330, 4294901760
        %v332 = vsub.f32 %v330, %v331
        %v333 = vand.u32 %v332, 4294901760
        %334 = vmatpush1.msra.mxu0 %v333
        %335 = vmatprep.subr.mxu0 0.0
        %v336 = vand.u32 %v228, 4294901760
        %v337 = vsub.f32 %v228, %v336
        %v338 = vand.u32 %v337, 4294901760
        %v339 = vsub.f32 %v337, %v338
        %v340 = vand.u32 %v339, 4294901760
        %341 = vmatpush1.msra.mxu0 %v340
        %342 = vmatprep.subr.mxu0 0.0
        %v343 = vand.u32 %v229, 4294901760
        %v344 = vsub.f32 %v229, %v343
        %v345 = vand.u32 %v344, 4294901760
        %v346 = vsub.f32 %v344, %v345
        %v347 = vand.u32 %v346, 4294901760
        %348 = vmatpush1.msra.mxu0 %v347
        %349 = vmatprep.subr.mxu0 0.0
        %v350 = vand.u32 %v230, 4294901760
        %v351 = vsub.f32 %v230, %v350
        %v352 = vand.u32 %v351, 4294901760
        %v353 = vsub.f32 %v351, %v352
        %v354 = vand.u32 %v353, 4294901760
        %355 = vmatpush1.msra.mxu0 %v354
        %356 = vmatprep.subr.mxu0 0.0
        %v357 = vand.u32 %v231, 4294901760
        %v358 = vsub.f32 %v231, %v357
        %v359 = vand.u32 %v358, 4294901760
        %v360 = vsub.f32 %v358, %v359
        %v361 = vand.u32 %v360, 4294901760
        %362 = vmatpush1.msra.mxu0 %v361
        %363 = vmatprep.subr.mxu0 0.0
        %v364 = vand.u32 %v232, 4294901760
        %v365 = vsub.f32 %v232, %v364
        %v366 = vand.u32 %v365, 4294901760
        %v367 = vsub.f32 %v365, %v366
        %v368 = vand.u32 %v367, 4294901760
        %369 = vmatpush1.msra.mxu0 %v368
        %370 = vmatprep.subr.mxu0 0.0
        %v371 = vand.u32 %v233, 4294901760
        %v372 = vsub.f32 %v233, %v371
        %v373 = vand.u32 %v372, 4294901760
        %v374 = vsub.f32 %v372, %v373
        %v375 = vand.u32 %v374, 4294901760
        %376 = vmatpush1.msra.mxu0 %v375
        %377 = vmatprep.subr.mxu0 0.0
        %378 = vmatpush1.msra.mxu0 0.0
        %379 = vmatprep.subr.mxu0 0.0
        %380 = vmatpush1.msra.mxu0 0.0
        %381 = vmatprep.subr.mxu0 0.0
        %382 = vmatpush1.msra.mxu0 0.0
        %383 = vmatprep.subr.mxu0 0.0
        %384 = vmatpush1.msra.mxu0 0.0
        %385 = vmatprep.subr.mxu0 0.0
        %386 = vmatpush1.msra.mxu0 0.0
        %387 = vmatprep.subr.mxu0 0.0
        %388 = vmatpush1.msra.mxu0 0.0
        %389 = vmatprep.subr.mxu0 0.0
        %390 = vmatpush1.msra.mxu0 0.0
        %391 = vmatprep.subr.mxu0 0.0
        %392 = vmatpush1.msra.mxu0 0.0
        %393 = vmatprep.subr.mxu0 0.0
        %394 = vmatpush1.msra.mxu0 0.0
        %395 = vmatprep.subr.mxu0 0.0
        %396 = vmatpush1.msra.mxu0 0.0
        %397 = vmatprep.subr.mxu0 0.0
        %398 = vmatpush1.msra.mxu0 0.0
        %399 = vmatprep.subr.mxu0 0.0
        %400 = vmatpush1.msra.mxu0 0.0
        %401 = vmatprep.subr.mxu0 0.0
        %402 = vmatpush1.msra.mxu0 0.0
        %403 = vmatprep.subr.mxu0 0.0
        %404 = vmatpush1.msra.mxu0 0.0
        %405 = vmatprep.subr.mxu0 0.0
        %406 = vmatpush1.msra.mxu0 0.0
        %407 = vmatprep.subr.mxu0 0.0
        %408 = vmatpush1.msra.mxu0 0.0
        %409 = vmatprep.subr.mxu0 0.0
        %410 = vmatpush1.msra.mxu0 0.0
        %411 = vmatprep.subr.mxu0 0.0
        %412 = vmatpush1.msra.mxu0 0.0
        %413 = vmatprep.subr.mxu0 0.0
        %414 = vmatpush1.msra.mxu0 0.0
        %415 = vmatprep.subr.mxu0 0.0
        %416 = vmatpush1.msra.mxu0 0.0
        %417 = vmatprep.subr.mxu0 0.0
        %418 = vmatpush1.msra.mxu0 0.0
        %419 = vmatprep.subr.mxu0 0.0
        %420 = vmatpush1.msra.mxu0 0.0
        %421 = vmatprep.subr.mxu0 0.0
        %422 = vmatpush1.msra.mxu0 0.0
        %423 = vmatprep.subr.mxu0 0.0
        %424 = vmatpush1.msra.mxu0 0.0
        %425 = vmatprep.mubr.f32.mxu0 0.0
        %v426 = vand.u32 %v236, 4294901760
        %427 = vmatmul.mubr.f32.gmra.mrb[0].mxu0 %v426
        %v428 = vpop.f32.mrb[0].mxu0
        %v429 = vadd.f32 %v318, %v428
        %v430 = vpop.f32.mrb[0].mxu0
        %431 = vdwg.mxu0
        %432 = vmatprep.subr.mxu0 0.0
        %v433 = vand.u32 %v226, 4294901760
        %v434 = vsub.f32 %v226, %v433
        %435 = vmatpush1.msra.mxu0 %v434
        %436 = vmatprep.subr.mxu0 0.0
        %v437 = vand.u32 %v227, 4294901760
        %v438 = vsub.f32 %v227, %v437
        %439 = vmatpush1.msra.mxu0 %v438
        %440 = vmatprep.subr.mxu0 0.0
        %v441 = vand.u32 %v228, 4294901760
        %v442 = vsub.f32 %v228, %v441
        %443 = vmatpush1.msra.mxu0 %v442
        %444 = vmatprep.subr.mxu0 0.0
        %v445 = vand.u32 %v229, 4294901760
        %v446 = vsub.f32 %v229, %v445
        %447 = vmatpush1.msra.mxu0 %v446
        %448 = vmatprep.subr.mxu0 0.0
        %v449 = vand.u32 %v230, 4294901760
        %v450 = vsub.f32 %v230, %v449
        %451 = vmatpush1.msra.mxu0 %v450
        %452 = vmatprep.subr.mxu0 0.0
        %v453 = vand.u32 %v231, 4294901760
        %v454 = vsub.f32 %v231, %v453
        %455 = vmatpush1.msra.mxu0 %v454
        %456 = vmatprep.subr.mxu0 0.0
        %v457 = vand.u32 %v232, 4294901760
        %v458 = vsub.f32 %v232, %v457
        %459 = vmatpush1.msra.mxu0 %v458
        %460 = vmatprep.subr.mxu0 0.0
        %v461 = vand.u32 %v233, 4294901760
        %v462 = vsub.f32 %v233, %v461
        %463 = vmatpush1.msra.mxu0 %v462
        %464 = vmatprep.subr.mxu0 0.0
        %465 = vmatpush1.msra.mxu0 0.0
        %466 = vmatprep.subr.mxu0 0.0
        %467 = vmatpush1.msra.mxu0 0.0
        %468 = vmatprep.subr.mxu0 0.0
        %469 = vmatpush1.msra.mxu0 0.0
        %470 = vmatprep.subr.mxu0 0.0
        %471 = vmatpush1.msra.mxu0 0.0
        %472 = vmatprep.subr.mxu0 0.0
        %473 = vmatpush1.msra.mxu0 0.0
        %474 = vmatprep.subr.mxu0 0.0
        %475 = vmatpush1.msra.mxu0 0.0
        %476 = vmatprep.subr.mxu0 0.0
        %477 = vmatpush1.msra.mxu0 0.0
        %478 = vmatprep.subr.mxu0 0.0
        %479 = vmatpush1.msra.mxu0 0.0
        %480 = vmatprep.subr.mxu0 0.0
        %481 = vmatpush1.msra.mxu0 0.0
        %482 = vmatprep.subr.mxu0 0.0
        %483 = vmatpush1.msra.mxu0 0.0
        %484 = vmatprep.subr.mxu0 0.0
        %485 = vmatpush1.msra.mxu0 0.0
        %486 = vmatprep.subr.mxu0 0.0
        %487 = vmatpush1.msra.mxu0 0.0
        %488 = vmatprep.subr.mxu0 0.0
        %489 = vmatpush1.msra.mxu0 0.0
        %490 = vmatprep.subr.mxu0 0.0
        %491 = vmatpush1.msra.mxu0 0.0
        %492 = vmatprep.subr.mxu0 0.0
        %493 = vmatpush1.msra.mxu0 0.0
        %494 = vmatprep.subr.mxu0 0.0
        %495 = vmatpush1.msra.mxu0 0.0
        %496 = vmatprep.subr.mxu0 0.0
        %497 = vmatpush1.msra.mxu0 0.0
        %498 = vmatprep.subr.mxu0 0.0
        %499 = vmatpush1.msra.mxu0 0.0
        %500 = vmatprep.subr.mxu0 0.0
        %501 = vmatpush1.msra.mxu0 0.0
        %502 = vmatprep.subr.mxu0 0.0
        %503 = vmatpush1.msra.mxu0 0.0
        %504 = vmatprep.subr.mxu0 0.0
        %505 = vmatpush1.msra.mxu0 0.0
        %506 = vmatprep.subr.mxu0 0.0
        %507 = vmatpush1.msra.mxu0 0.0
        %508 = vmatprep.subr.mxu0 0.0
        %509 = vmatpush1.msra.mxu0 0.0
        %510 = vmatprep.subr.mxu0 0.0
        %511 = vmatpush1.msra.mxu0 0.0
        %512 = vmatprep.mubr.f32.mxu0 0.0
        %v513 = vand.u32 %v236, 4294901760
        %v514 = vsub.f32 %v236, %v513
        %515 = vmatmul.mubr.f32.gmra.mrb[0].mxu0 %v514
        %v516 = vpop.f32.mrb[0].mxu0
        %v517 = vadd.f32 %v429, %v516
        %v518 = vpop.f32.mrb[0].mxu0
        %519 = vdwg.mxu0
        %520 = vmatprep.subr.mxu0 0.0
        %v521 = vand.u32 %v226, 4294901760
        %522 = vmatpush1.msra.mxu0 %v521
        %523 = vmatprep.subr.mxu0 0.0
        %v524 = vand.u32 %v227, 4294901760
        %525 = vmatpush1.msra.mxu0 %v524
        %526 = vmatprep.subr.mxu0 0.0
        %v527 = vand.u32 %v228, 4294901760
        %528 = vmatpush1.msra.mxu0 %v527
        %529 = vmatprep.subr.mxu0 0.0
        %v530 = vand.u32 %v229, 4294901760
        %531 = vmatpush1.msra.mxu0 %v530
        %532 = vmatprep.subr.mxu0 0.0
        %v533 = vand.u32 %v230, 4294901760
        %534 = vmatpush1.msra.mxu0 %v533
        %535 = vmatprep.subr.mxu0 0.0
        %v536 = vand.u32 %v231, 4294901760
        %537 = vmatpush1.msra.mxu0 %v536
        %538 = vmatprep.subr.mxu0 0.0
        %v539 = vand.u32 %v232, 4294901760
        %540 = vmatpush1.msra.mxu0 %v539
        %541 = vmatprep.subr.mxu0 0.0
        %v542 = vand.u32 %v233, 4294901760
        %543 = vmatpush1.msra.mxu0 %v542
        %544 = vmatprep.subr.mxu0 0.0
        %545 = vmatpush1.msra.mxu0 0.0
        %546 = vmatprep.subr.mxu0 0.0
        %547 = vmatpush1.msra.mxu0 0.0
        %548 = vmatprep.subr.mxu0 0.0
        %549 = vmatpush1.msra.mxu0 0.0
        %550 = vmatprep.subr.mxu0 0.0
        %551 = vmatpush1.msra.mxu0 0.0
        %552 = vmatprep.subr.mxu0 0.0
        %553 = vmatpush1.msra.mxu0 0.0
        %554 = vmatprep.subr.mxu0 0.0
        %555 = vmatpush1.msra.mxu0 0.0
        %556 = vmatprep.subr.mxu0 0.0
        %557 = vmatpush1.msra.mxu0 0.0
        %558 = vmatprep.subr.mxu0 0.0
        %559 = vmatpush1.msra.mxu0 0.0
        %560 = vmatprep.subr.mxu0 0.0
        %561 = vmatpush1.msra.mxu0 0.0
        %562 = vmatprep.subr.mxu0 0.0
        %563 = vmatpush1.msra.mxu0 0.0
        %564 = vmatprep.subr.mxu0 0.0
        %565 = vmatpush1.msra.mxu0 0.0
        %566 = vmatprep.subr.mxu0 0.0
        %567 = vmatpush1.msra.mxu0 0.0
        %568 = vmatprep.subr.mxu0 0.0
        %569 = vmatpush1.msra.mxu0 0.0
        %570 = vmatprep.subr.mxu0 0.0
        %571 = vmatpush1.msra.mxu0 0.0
        %572 = vmatprep.subr.mxu0 0.0
        %573 = vmatpush1.msra.mxu0 0.0
        %574 = vmatprep.subr.mxu0 0.0
        %575 = vmatpush1.msra.mxu0 0.0
        %576 = vmatprep.subr.mxu0 0.0
        %577 = vmatpush1.msra.mxu0 0.0
        %578 = vmatprep.subr.mxu0 0.0
        %579 = vmatpush1.msra.mxu0 0.0
        %580 = vmatprep.subr.mxu0 0.0
        %581 = vmatpush1.msra.mxu0 0.0
        %582 = vmatprep.subr.mxu0 0.0
        %583 = vmatpush1.msra.mxu0 0.0
        %584 = vmatprep.subr.mxu0 0.0
        %585 = vmatpush1.msra.mxu0 0.0
        %586 = vmatprep.subr.mxu0 0.0
        %587 = vmatpush1.msra.mxu0 0.0
        %588 = vmatprep.subr.mxu0 0.0
        %589 = vmatpush1.msra.mxu0 0.0
        %590 = vmatprep.subr.mxu0 0.0
        %591 = vmatpush1.msra.mxu0 0.0
        %592 = vmatprep.mubr.f32.mxu0 0.0
        %v593 = vand.u32 %v236, 4294901760
        %v594 = vsub.f32 %v236, %v593
        %v595 = vand.u32 %v594, 4294901760
        %596 = vmatmul.mubr.f32.gmra.mrb[0].mxu0 %v595
        %v597 = vpop.f32.mrb[0].mxu0
        %v598 = vadd.f32 %v517, %v597
        %v599 = vpop.f32.mrb[0].mxu0
        %600 = vdwg.mxu0
        %601 = vmatprep.subr.mxu0 0.0
        %v602 = vand.u32 %v226, 4294901760
        %v603 = vsub.f32 %v226, %v602
        %v604 = vand.u32 %v603, 4294901760
        %605 = vmatpush1.msra.mxu0 %v604
        %606 = vmatprep.subr.mxu0 0.0
        %v607 = vand.u32 %v227, 4294901760
        %v608 = vsub.f32 %v227, %v607
        %v609 = vand.u32 %v608, 4294901760
        %610 = vmatpush1.msra.mxu0 %v609
        %611 = vmatprep.subr.mxu0 0.0
        %v612 = vand.u32 %v228, 4294901760
        %v613 = vsub.f32 %v228, %v612
        %v614 = vand.u32 %v613, 4294901760
        %615 = vmatpush1.msra.mxu0 %v614
        %616 = vmatprep.subr.mxu0 0.0
        %v617 = vand.u32 %v229, 4294901760
        %v618 = vsub.f32 %v229, %v617
        %v619 = vand.u32 %v618, 4294901760
        %620 = vmatpush1.msra.mxu0 %v619
        %621 = vmatprep.subr.mxu0 0.0
        %v622 = vand.u32 %v230, 4294901760
        %v623 = vsub.f32 %v230, %v622
        %v624 = vand.u32 %v623, 4294901760
        %625 = vmatpush1.msra.mxu0 %v624
        %626 = vmatprep.subr.mxu0 0.0
        %v627 = vand.u32 %v231, 4294901760
        %v628 = vsub.f32 %v231, %v627
        %v629 = vand.u32 %v628, 4294901760
        %630 = vmatpush1.msra.mxu0 %v629
        %631 = vmatprep.subr.mxu0 0.0
        %v632 = vand.u32 %v232, 4294901760
        %v633 = vsub.f32 %v232, %v632
        %v634 = vand.u32 %v633, 4294901760
        %635 = vmatpush1.msra.mxu0 %v634
        %636 = vmatprep.subr.mxu0 0.0
        %v637 = vand.u32 %v233, 4294901760
        %v638 = vsub.f32 %v233, %v637
        %v639 = vand.u32 %v638, 4294901760
        %640 = vmatpush1.msra.mxu0 %v639
        %641 = vmatprep.subr.mxu0 0.0
        %642 = vmatpush1.msra.mxu0 0.0
        %643 = vmatprep.subr.mxu0 0.0
        %644 = vmatpush1.msra.mxu0 0.0
        %645 = vmatprep.subr.mxu0 0.0
        %646 = vmatpush1.msra.mxu0 0.0
        %647 = vmatprep.subr.mxu0 0.0
        %648 = vmatpush1.msra.mxu0 0.0
        %649 = vmatprep.subr.mxu0 0.0
        %650 = vmatpush1.msra.mxu0 0.0
        %651 = vmatprep.subr.mxu0 0.0
        %652 = vmatpush1.msra.mxu0 0.0
        %653 = vmatprep.subr.mxu0 0.0
        %654 = vmatpush1.msra.mxu0 0.0
        %655 = vmatprep.subr.mxu0 0.0
        %656 = vmatpush1.msra.mxu0 0.0
        %657 = vmatprep.subr.mxu0 0.0
        %658 = vmatpush1.msra.mxu0 0.0
        %659 = vmatprep.subr.mxu0 0.0
        %660 = vmatpush1.msra.mxu0 0.0
        %661 = vmatprep.subr.mxu0 0.0
        %662 = vmatpush1.msra.mxu0 0.0
        %663 = vmatprep.subr.mxu0 0.0
        %664 = vmatpush1.msra.mxu0 0.0
        %665 = vmatprep.subr.mxu0 0.0
        %666 = vmatpush1.msra.mxu0 0.0
        %667 = vmatprep.subr.mxu0 0.0
        %668 = vmatpush1.msra.mxu0 0.0
        %669 = vmatprep.subr.mxu0 0.0
        %670 = vmatpush1.msra.mxu0 0.0
        %671 = vmatprep.subr.mxu0 0.0
        %672 = vmatpush1.msra.mxu0 0.0
        %673 = vmatprep.subr.mxu0 0.0
        %674 = vmatpush1.msra.mxu0 0.0
        %675 = vmatprep.subr.mxu0 0.0
        %676 = vmatpush1.msra.mxu0 0.0
        %677 = vmatprep.subr.mxu0 0.0
        %678 = vmatpush1.msra.mxu0 0.0
        %679 = vmatprep.subr.mxu0 0.0
        %680 = vmatpush1.msra.mxu0 0.0
        %681 = vmatprep.subr.mxu0 0.0
        %682 = vmatpush1.msra.mxu0 0.0
        %683 = vmatprep.subr.mxu0 0.0
        %684 = vmatpush1.msra.mxu0 0.0
        %685 = vmatprep.subr.mxu0 0.0
        %686 = vmatpush1.msra.mxu0 0.0
        %687 = vmatprep.subr.mxu0 0.0
        %688 = vmatpush1.msra.mxu0 0.0
        %689 = vmatprep.mubr.f32.mxu0 0.0
        %v690 = vand.u32 %v236, 4294901760
        %691 = vmatmul.mubr.f32.gmra.mrb[0].mxu0 %v690
        %v692 = vpop.f32.mrb[0].mxu0
        %v693 = vadd.f32 %v598, %v692
        %v694 = vpop.f32.mrb[0].mxu0
        %695 = vdwg.mxu0
        %696 = vmatprep.subr.mxu0 0.0
        %v697 = vand.u32 %v226, 4294901760
        %698 = vmatpush1.msra.mxu0 %v697
        %699 = vmatprep.subr.mxu0 0.0
        %v700 = vand.u32 %v227, 4294901760
        %701 = vmatpush1.msra.mxu0 %v700
        %702 = vmatprep.subr.mxu0 0.0
        %v703 = vand.u32 %v228, 4294901760
        %704 = vmatpush1.msra.mxu0 %v703
        %705 = vmatprep.subr.mxu0 0.0
        %v706 = vand.u32 %v229, 4294901760
        %707 = vmatpush1.msra.mxu0 %v706
        %708 = vmatprep.subr.mxu0 0.0
        %v709 = vand.u32 %v230, 4294901760
        %710 = vmatpush1.msra.mxu0 %v709
        %711 = vmatprep.subr.mxu0 0.0
        %v712 = vand.u32 %v231, 4294901760
        %713 = vmatpush1.msra.mxu0 %v712
        %714 = vmatprep.subr.mxu0 0.0
        %v715 = vand.u32 %v232, 4294901760
        %716 = vmatpush1.msra.mxu0 %v715
        %717 = vmatprep.subr.mxu0 0.0
        %v718 = vand.u32 %v233, 4294901760
        %719 = vmatpush1.msra.mxu0 %v718
        %720 = vmatprep.subr.mxu0 0.0
        %721 = vmatpush1.msra.mxu0 0.0
        %722 = vmatprep.subr.mxu0 0.0
        %723 = vmatpush1.msra.mxu0 0.0
        %724 = vmatprep.subr.mxu0 0.0
        %725 = vmatpush1.msra.mxu0 0.0
        %726 = vmatprep.subr.mxu0 0.0
        %727 = vmatpush1.msra.mxu0 0.0
        %728 = vmatprep.subr.mxu0 0.0
        %729 = vmatpush1.msra.mxu0 0.0
        %730 = vmatprep.subr.mxu0 0.0
        %731 = vmatpush1.msra.mxu0 0.0
        %732 = vmatprep.subr.mxu0 0.0
        %733 = vmatpush1.msra.mxu0 0.0
        %734 = vmatprep.subr.mxu0 0.0
        %735 = vmatpush1.msra.mxu0 0.0
        %736 = vmatprep.subr.mxu0 0.0
        %737 = vmatpush1.msra.mxu0 0.0
        %738 = vmatprep.subr.mxu0 0.0
        %739 = vmatpush1.msra.mxu0 0.0
        %740 = vmatprep.subr.mxu0 0.0
        %741 = vmatpush1.msra.mxu0 0.0
        %742 = vmatprep.subr.mxu0 0.0
        %743 = vmatpush1.msra.mxu0 0.0
        %744 = vmatprep.subr.mxu0 0.0
        %745 = vmatpush1.msra.mxu0 0.0
        %746 = vmatprep.subr.mxu0 0.0
        %747 = vmatpush1.msra.mxu0 0.0
        %748 = vmatprep.subr.mxu0 0.0
        %749 = vmatpush1.msra.mxu0 0.0
        %750 = vmatprep.subr.mxu0 0.0
        %751 = vmatpush1.msra.mxu0 0.0
        %752 = vmatprep.subr.mxu0 0.0
        %753 = vmatpush1.msra.mxu0 0.0
        %754 = vmatprep.subr.mxu0 0.0
        %755 = vmatpush1.msra.mxu0 0.0
        %756 = vmatprep.subr.mxu0 0.0
        %757 = vmatpush1.msra.mxu0 0.0
        %758 = vmatprep.subr.mxu0 0.0
        %759 = vmatpush1.msra.mxu0 0.0
        %760 = vmatprep.subr.mxu0 0.0
        %761 = vmatpush1.msra.mxu0 0.0
        %762 = vmatprep.subr.mxu0 0.0
        %763 = vmatpush1.msra.mxu0 0.0
        %764 = vmatprep.subr.mxu0 0.0
        %765 = vmatpush1.msra.mxu0 0.0
        %766 = vmatprep.subr.mxu0 0.0
        %767 = vmatpush1.msra.mxu0 0.0
        %768 = vmatprep.mubr.f32.mxu0 0.0
        %v769 = vand.u32 %v236, 4294901760
        %770 = vmatmul.mubr.f32.gmra.mrb[0].mxu0 %v769
        %v771 = vpop.f32.mrb[0].mxu0
        %v772 = vadd.f32 %v693, %v771
        %v773 = vpop.f32.mrb[0].mxu0
        %774 = vdwg.mxu0
        %v775 = vld [vmem:[%s3] sm:$0xff]
        %vm776 = vcmask 64512
        %v778 = vsel %vm776, %v225, 0
        %780 = vmatprep.subr.mxu0 0.0
        %v781 = vand.u32 %v775, 4294901760
        %782 = vmatpush1.msra.mxu0 %v781
        %783 = vmatprep.subr.mxu0 0.0
        %784 = vmatpush1.msra.mxu0 0.0
        %785 = vmatprep.subr.mxu0 0.0
        %786 = vmatpush1.msra.mxu0 0.0
        %787 = vmatprep.subr.mxu0 0.0
        %788 = vmatpush1.msra.mxu0 0.0
        %789 = vmatprep.subr.mxu0 0.0
        %790 = vmatpush1.msra.mxu0 0.0
        %791 = vmatprep.subr.mxu0 0.0
        %792 = vmatpush1.msra.mxu0 0.0
        %793 = vmatprep.subr.mxu0 0.0
        %794 = vmatpush1.msra.mxu0 0.0
        %795 = vmatprep.subr.mxu0 0.0
        %796 = vmatpush1.msra.mxu0 0.0
        %797 = vmatprep.subr.mxu0 0.0
        %798 = vmatpush1.msra.mxu0 0.0
        %799 = vmatprep.subr.mxu0 0.0
        %800 = vmatpush1.msra.mxu0 0.0
        %801 = vmatprep.subr.mxu0 0.0
        %802 = vmatpush1.msra.mxu0 0.0
        %803 = vmatprep.subr.mxu0 0.0
        %804 = vmatpush1.msra.mxu0 0.0
        %805 = vmatprep.subr.mxu0 0.0
        %806 = vmatpush1.msra.mxu0 0.0
        %807 = vmatprep.subr.mxu0 0.0
        %808 = vmatpush1.msra.mxu0 0.0
        %809 = vmatprep.subr.mxu0 0.0
        %810 = vmatpush1.msra.mxu0 0.0
        %811 = vmatprep.subr.mxu0 0.0
        %812 = vmatpush1.msra.mxu0 0.0
        %813 = vmatprep.subr.mxu0 0.0
        %814 = vmatpush1.msra.mxu0 0.0
        %815 = vmatprep.subr.mxu0 0.0
        %816 = vmatpush1.msra.mxu0 0.0
        %817 = vmatprep.subr.mxu0 0.0
        %818 = vmatpush1.msra.mxu0 0.0
        %819 = vmatprep.subr.mxu0 0.0
        %820 = vmatpush1.msra.mxu0 0.0
        %821 = vmatprep.subr.mxu0 0.0
        %822 = vmatpush1.msra.mxu0 0.0
        %823 = vmatprep.subr.mxu0 0.0
        %824 = vmatpush1.msra.mxu0 0.0
        %825 = vmatprep.subr.mxu0 0.0
        %826 = vmatpush1.msra.mxu0 0.0
        %827 = vmatprep.subr.mxu0 0.0
        %828 = vmatpush1.msra.mxu0 0.0
        %829 = vmatprep.subr.mxu0 0.0
        %830 = vmatpush1.msra.mxu0 0.0
        %831 = vmatprep.subr.mxu0 0.0
        %832 = vmatpush1.msra.mxu0 0.0
        %833 = vmatprep.subr.mxu0 0.0
        %834 = vmatpush1.msra.mxu0 0.0
        %835 = vmatprep.subr.mxu0 0.0
        %836 = vmatpush1.msra.mxu0 0.0
        %837 = vmatprep.subr.mxu0 0.0
        %838 = vmatpush1.msra.mxu0 0.0
        %839 = vmatprep.subr.mxu0 0.0
        %840 = vmatpush1.msra.mxu0 0.0
        %841 = vmatprep.subr.mxu0 0.0
        %842 = vmatpush1.msra.mxu0 0.0
        %843 = vmatprep.subr.mxu0 0.0
        %844 = vmatpush1.msra.mxu0 0.0
        %845 = vmatprep.mubr.f32.mxu0 0.0
        %v846 = vand.u32 %v778, 4294901760
        %v847 = vsub.f32 %v778, %v846
        %v848 = vand.u32 %v847, 4294901760
        %v849 = vsub.f32 %v847, %v848
        %v850 = vand.u32 %v849, 4294901760
        %851 = vmatmul.mubr.f32.gmra.mrb[0].mxu0 %v850
        %v852 = vpop.f32.mrb[0].mxu0
        %v853 = vadd.f32 0.0, %v852
        %v854 = vpop.f32.mrb[0].mxu0
        %855 = vdwg.mxu0
        %856 = vmatprep.subr.mxu0 0.0
        %v857 = vand.u32 %v775, 4294901760
        %v858 = vsub.f32 %v775, %v857
        %v859 = vand.u32 %v858, 4294901760
        %v860 = vsub.f32 %v858, %v859
        %v861 = vand.u32 %v860, 4294901760
        %862 = vmatpush1.msra.mxu0 %v861
        %863 = vmatprep.subr.mxu0 0.0
        %864 = vmatpush1.msra.mxu0 0.0
        %865 = vmatprep.subr.mxu0 0.0
        %866 = vmatpush1.msra.mxu0 0.0
        %867 = vmatprep.subr.mxu0 0.0
        %868 = vmatpush1.msra.mxu0 0.0
        %869 = vmatprep.subr.mxu0 0.0
        %870 = vmatpush1.msra.mxu0 0.0
        %871 = vmatprep.subr.mxu0 0.0
        %872 = vmatpush1.msra.mxu0 0.0
        %873 = vmatprep.subr.mxu0 0.0
        %874 = vmatpush1.msra.mxu0 0.0
        %875 = vmatprep.subr.mxu0 0.0
        %876 = vmatpush1.msra.mxu0 0.0
        %877 = vmatprep.subr.mxu0 0.0
        %878 = vmatpush1.msra.mxu0 0.0
        %879 = vmatprep.subr.mxu0 0.0
        %880 = vmatpush1.msra.mxu0 0.0
        %881 = vmatprep.subr.mxu0 0.0
        %882 = vmatpush1.msra.mxu0 0.0
        %883 = vmatprep.subr.mxu0 0.0
        %884 = vmatpush1.msra.mxu0 0.0
        %885 = vmatprep.subr.mxu0 0.0
        %886 = vmatpush1.msra.mxu0 0.0
        %887 = vmatprep.subr.mxu0 0.0
        %888 = vmatpush1.msra.mxu0 0.0
        %889 = vmatprep.subr.mxu0 0.0
        %890 = vmatpush1.msra.mxu0 0.0
        %891 = vmatprep.subr.mxu0 0.0
        %892 = vmatpush1.msra.mxu0 0.0
        %893 = vmatprep.subr.mxu0 0.0
        %894 = vmatpush1.msra.mxu0 0.0
        %895 = vmatprep.subr.mxu0 0.0
        %896 = vmatpush1.msra.mxu0 0.0
        %897 = vmatprep.subr.mxu0 0.0
        %898 = vmatpush1.msra.mxu0 0.0
        %899 = vmatprep.subr.mxu0 0.0
        %900 = vmatpush1.msra.mxu0 0.0
        %901 = vmatprep.subr.mxu0 0.0
        %902 = vmatpush1.msra.mxu0 0.0
        %903 = vmatprep.subr.mxu0 0.0
        %904 = vmatpush1.msra.mxu0 0.0
        %905 = vmatprep.subr.mxu0 0.0
        %906 = vmatpush1.msra.mxu0 0.0
        %907 = vmatprep.subr.mxu0 0.0
        %908 = vmatpush1.msra.mxu0 0.0
        %909 = vmatprep.subr.mxu0 0.0
        %910 = vmatpush1.msra.mxu0 0.0
        %911 = vmatprep.subr.mxu0 0.0
        %912 = vmatpush1.msra.mxu0 0.0
        %913 = vmatprep.subr.mxu0 0.0
        %914 = vmatpush1.msra.mxu0 0.0
        %915 = vmatprep.subr.mxu0 0.0
        %916 = vmatpush1.msra.mxu0 0.0
        %917 = vmatprep.subr.mxu0 0.0
        %918 = vmatpush1.msra.mxu0 0.0
        %919 = vmatprep.subr.mxu0 0.0
        %920 = vmatpush1.msra.mxu0 0.0
        %921 = vmatprep.subr.mxu0 0.0
        %922 = vmatpush1.msra.mxu0 0.0
        %923 = vmatprep.subr.mxu0 0.0
        %924 = vmatpush1.msra.mxu0 0.0
        %925 = vmatprep.mubr.f32.mxu0 0.0
        %v926 = vand.u32 %v778, 4294901760
        %927 = vmatmul.mubr.f32.gmra.mrb[0].mxu0 %v926
        %v928 = vpop.f32.mrb[0].mxu0
        %v929 = vadd.f32 %v853, %v928
        %v930 = vpop.f32.mrb[0].mxu0
        %931 = vdwg.mxu0
        %932 = vmatprep.subr.mxu0 0.0
        %v933 = vand.u32 %v775, 4294901760
        %v934 = vsub.f32 %v775, %v933
        %935 = vmatpush1.msra.mxu0 %v934
        %936 = vmatprep.subr.mxu0 0.0
        %937 = vmatpush1.msra.mxu0 0.0
        %938 = vmatprep.subr.mxu0 0.0
        %939 = vmatpush1.msra.mxu0 0.0
        %940 = vmatprep.subr.mxu0 0.0
        %941 = vmatpush1.msra.mxu0 0.0
        %942 = vmatprep.subr.mxu0 0.0
        %943 = vmatpush1.msra.mxu0 0.0
        %944 = vmatprep.subr.mxu0 0.0
        %945 = vmatpush1.msra.mxu0 0.0
        %946 = vmatprep.subr.mxu0 0.0
        %947 = vmatpush1.msra.mxu0 0.0
        %948 = vmatprep.subr.mxu0 0.0
        %949 = vmatpush1.msra.mxu0 0.0
        %950 = vmatprep.subr.mxu0 0.0
        %951 = vmatpush1.msra.mxu0 0.0
        %952 = vmatprep.subr.mxu0 0.0
        %953 = vmatpush1.msra.mxu0 0.0
        %954 = vmatprep.subr.mxu0 0.0
        %955 = vmatpush1.msra.mxu0 0.0
        %956 = vmatprep.subr.mxu0 0.0
        %957 = vmatpush1.msra.mxu0 0.0
        %958 = vmatprep.subr.mxu0 0.0
        %959 = vmatpush1.msra.mxu0 0.0
        %960 = vmatprep.subr.mxu0 0.0
        %961 = vmatpush1.msra.mxu0 0.0
        %962 = vmatprep.subr.mxu0 0.0
        %963 = vmatpush1.msra.mxu0 0.0
        %964 = vmatprep.subr.mxu0 0.0
        %965 = vmatpush1.msra.mxu0 0.0
        %966 = vmatprep.subr.mxu0 0.0
        %967 = vmatpush1.msra.mxu0 0.0
        %968 = vmatprep.subr.mxu0 0.0
        %969 = vmatpush1.msra.mxu0 0.0
        %970 = vmatprep.subr.mxu0 0.0
        %971 = vmatpush1.msra.mxu0 0.0
        %972 = vmatprep.subr.mxu0 0.0
        %973 = vmatpush1.msra.mxu0 0.0
        %974 = vmatprep.subr.mxu0 0.0
        %975 = vmatpush1.msra.mxu0 0.0
        %976 = vmatprep.subr.mxu0 0.0
        %977 = vmatpush1.msra.mxu0 0.0
        %978 = vmatprep.subr.mxu0 0.0
        %979 = vmatpush1.msra.mxu0 0.0
        %980 = vmatprep.subr.mxu0 0.0
        %981 = vmatpush1.msra.mxu0 0.0
        %982 = vmatprep.subr.mxu0 0.0
        %983 = vmatpush1.msra.mxu0 0.0
        %984 = vmatprep.subr.mxu0 0.0
        %985 = vmatpush1.msra.mxu0 0.0
        %986 = vmatprep.subr.mxu0 0.0
        %987 = vmatpush1.msra.mxu0 0.0
        %988 = vmatprep.subr.mxu0 0.0
        %989 = vmatpush1.msra.mxu0 0.0
        %990 = vmatprep.subr.mxu0 0.0
        %991 = vmatpush1.msra.mxu0 0.0
        %992 = vmatprep.subr.mxu0 0.0
        %993 = vmatpush1.msra.mxu0 0.0
        %994 = vmatprep.subr.mxu0 0.0
        %995 = vmatpush1.msra.mxu0 0.0
        %996 = vmatprep.subr.mxu0 0.0
        %997 = vmatpush1.msra.mxu0 0.0
        %998 = vmatprep.mubr.f32.mxu0 0.0
        %v999 = vand.u32 %v778, 4294901760
        %v1000 = vsub.f32 %v778, %v999
        %1001 = vmatmul.mubr.f32.gmra.mrb[0].mxu0 %v1000
        %v1002 = vpop.f32.mrb[0].mxu0
        %v1003 = vadd.f32 %v929, %v1002
        %v1004 = vpop.f32.mrb[0].mxu0
        %1005 = vdwg.mxu0
        %1006 = vmatprep.subr.mxu0 0.0
        %v1007 = vand.u32 %v775, 4294901760
        %1008 = vmatpush1.msra.mxu0 %v1007
        %1009 = vmatprep.subr.mxu0 0.0
        %1010 = vmatpush1.msra.mxu0 0.0
        %1011 = vmatprep.subr.mxu0 0.0
        %1012 = vmatpush1.msra.mxu0 0.0
        %1013 = vmatprep.subr.mxu0 0.0
        %1014 = vmatpush1.msra.mxu0 0.0
        %1015 = vmatprep.subr.mxu0 0.0
        %1016 = vmatpush1.msra.mxu0 0.0
        %1017 = vmatprep.subr.mxu0 0.0
        %1018 = vmatpush1.msra.mxu0 0.0
        %1019 = vmatprep.subr.mxu0 0.0
        %1020 = vmatpush1.msra.mxu0 0.0
        %1021 = vmatprep.subr.mxu0 0.0
        %1022 = vmatpush1.msra.mxu0 0.0
        %1023 = vmatprep.subr.mxu0 0.0
        %1024 = vmatpush1.msra.mxu0 0.0
        %1025 = vmatprep.subr.mxu0 0.0
        %1026 = vmatpush1.msra.mxu0 0.0
        %1027 = vmatprep.subr.mxu0 0.0
        %1028 = vmatpush1.msra.mxu0 0.0
        %1029 = vmatprep.subr.mxu0 0.0
        %1030 = vmatpush1.msra.mxu0 0.0
        %1031 = vmatprep.subr.mxu0 0.0
        %1032 = vmatpush1.msra.mxu0 0.0
        %1033 = vmatprep.subr.mxu0 0.0
        %1034 = vmatpush1.msra.mxu0 0.0
        %1035 = vmatprep.subr.mxu0 0.0
        %1036 = vmatpush1.msra.mxu0 0.0
        %1037 = vmatprep.subr.mxu0 0.0
        %1038 = vmatpush1.msra.mxu0 0.0
        %1039 = vmatprep.subr.mxu0 0.0
        %1040 = vmatpush1.msra.mxu0 0.0
        %1041 = vmatprep.subr.mxu0 0.0
        %1042 = vmatpush1.msra.mxu0 0.0
        %1043 = vmatprep.subr.mxu0 0.0
        %1044 = vmatpush1.msra.mxu0 0.0
        %1045 = vmatprep.subr.mxu0 0.0
        %1046 = vmatpush1.msra.mxu0 0.0
        %1047 = vmatprep.subr.mxu0 0.0
        %1048 = vmatpush1.msra.mxu0 0.0
        %1049 = vmatprep.subr.mxu0 0.0
        %1050 = vmatpush1.msra.mxu0 0.0
        %1051 = vmatprep.subr.mxu0 0.0
        %1052 = vmatpush1.msra.mxu0 0.0
        %1053 = vmatprep.subr.mxu0 0.0
        %1054 = vmatpush1.msra.mxu0 0.0
        %1055 = vmatprep.subr.mxu0 0.0
        %1056 = vmatpush1.msra.mxu0 0.0
        %1057 = vmatprep.subr.mxu0 0.0
        %1058 = vmatpush1.msra.mxu0 0.0
        %1059 = vmatprep.subr.mxu0 0.0
        %1060 = vmatpush1.msra.mxu0 0.0
        %1061 = vmatprep.subr.mxu0 0.0
        %1062 = vmatpush1.msra.mxu0 0.0
        %1063 = vmatprep.subr.mxu0 0.0
        %1064 = vmatpush1.msra.mxu0 0.0
        %1065 = vmatprep.subr.mxu0 0.0
        %1066 = vmatpush1.msra.mxu0 0.0
        %1067 = vmatprep.subr.mxu0 0.0
        %1068 = vmatpush1.msra.mxu0 0.0
        %1069 = vmatprep.subr.mxu0 0.0
        %1070 = vmatpush1.msra.mxu0 0.0
        %1071 = vmatprep.mubr.f32.mxu0 0.0
        %v1072 = vand.u32 %v778, 4294901760
        %v1073 = vsub.f32 %v778, %v1072
        %v1074 = vand.u32 %v1073, 4294901760
        %1075 = vmatmul.mubr.f32.gmra.mrb[0].mxu0 %v1074
        %v1076 = vpop.f32.mrb[0].mxu0
        %v1077 = vadd.f32 %v1003, %v1076
        %v1078 = vpop.f32.mrb[0].mxu0
        %1079 = vdwg.mxu0
        %1080 = vmatprep.subr.mxu0 0.0
        %v1081 = vand.u32 %v775, 4294901760
        %v1082 = vsub.f32 %v775, %v1081
        %v1083 = vand.u32 %v1082, 4294901760
        %1084 = vmatpush1.msra.mxu0 %v1083
        %1085 = vmatprep.subr.mxu0 0.0
        %1086 = vmatpush1.msra.mxu0 0.0
        %1087 = vmatprep.subr.mxu0 0.0
        %1088 = vmatpush1.msra.mxu0 0.0
        %1089 = vmatprep.subr.mxu0 0.0
        %1090 = vmatpush1.msra.mxu0 0.0
        %1091 = vmatprep.subr.mxu0 0.0
        %1092 = vmatpush1.msra.mxu0 0.0
        %1093 = vmatprep.subr.mxu0 0.0
        %1094 = vmatpush1.msra.mxu0 0.0
        %1095 = vmatprep.subr.mxu0 0.0
        %1096 = vmatpush1.msra.mxu0 0.0
        %1097 = vmatprep.subr.mxu0 0.0
        %1098 = vmatpush1.msra.mxu0 0.0
        %1099 = vmatprep.subr.mxu0 0.0
        %1100 = vmatpush1.msra.mxu0 0.0
        %1101 = vmatprep.subr.mxu0 0.0
        %1102 = vmatpush1.msra.mxu0 0.0
        %1103 = vmatprep.subr.mxu0 0.0
        %1104 = vmatpush1.msra.mxu0 0.0
        %1105 = vmatprep.subr.mxu0 0.0
        %1106 = vmatpush1.msra.mxu0 0.0
        %1107 = vmatprep.subr.mxu0 0.0
        %1108 = vmatpush1.msra.mxu0 0.0
        %1109 = vmatprep.subr.mxu0 0.0
        %1110 = vmatpush1.msra.mxu0 0.0
        %1111 = vmatprep.subr.mxu0 0.0
        %1112 = vmatpush1.msra.mxu0 0.0
        %1113 = vmatprep.subr.mxu0 0.0
        %1114 = vmatpush1.msra.mxu0 0.0
        %1115 = vmatprep.subr.mxu0 0.0
        %1116 = vmatpush1.msra.mxu0 0.0
        %1117 = vmatprep.subr.mxu0 0.0
        %1118 = vmatpush1.msra.mxu0 0.0
        %1119 = vmatprep.subr.mxu0 0.0
        %1120 = vmatpush1.msra.mxu0 0.0
        %1121 = vmatprep.subr.mxu0 0.0
        %1122 = vmatpush1.msra.mxu0 0.0
        %1123 = vmatprep.subr.mxu0 0.0
        %1124 = vmatpush1.msra.mxu0 0.0
        %1125 = vmatprep.subr.mxu0 0.0
        %1126 = vmatpush1.msra.mxu0 0.0
        %1127 = vmatprep.subr.mxu0 0.0
        %1128 = vmatpush1.msra.mxu0 0.0
        %1129 = vmatprep.subr.mxu0 0.0
        %1130 = vmatpush1.msra.mxu0 0.0
        %1131 = vmatprep.subr.mxu0 0.0
        %1132 = vmatpush1.msra.mxu0 0.0
        %1133 = vmatprep.subr.mxu0 0.0
        %1134 = vmatpush1.msra.mxu0 0.0
        %1135 = vmatprep.subr.mxu0 0.0
        %1136 = vmatpush1.msra.mxu0 0.0
        %1137 = vmatprep.subr.mxu0 0.0
        %1138 = vmatpush1.msra.mxu0 0.0
        %1139 = vmatprep.subr.mxu0 0.0
        %1140 = vmatpush1.msra.mxu0 0.0
        %1141 = vmatprep.subr.mxu0 0.0
        %1142 = vmatpush1.msra.mxu0 0.0
        %1143 = vmatprep.subr.mxu0 0.0
        %1144 = vmatpush1.msra.mxu0 0.0
        %1145 = vmatprep.subr.mxu0 0.0
        %1146 = vmatpush1.msra.mxu0 0.0
        %1147 = vmatprep.mubr.f32.mxu0 0.0
        %v1148 = vand.u32 %v778, 4294901760
        %1149 = vmatmul.mubr.f32.gmra.mrb[0].mxu0 %v1148
        %v1150 = vpop.f32.mrb[0].mxu0
        %v1151 = vadd.f32 %v1077, %v1150
        %v1152 = vpop.f32.mrb[0].mxu0
        %1153 = vdwg.mxu0
        %1154 = vmatprep.subr.mxu0 0.0
        %v1155 = vand.u32 %v775, 4294901760
        %1156 = vmatpush1.msra.mxu0 %v1155
        %1157 = vmatprep.subr.mxu0 0.0
        %1158 = vmatpush1.msra.mxu0 0.0
        %1159 = vmatprep.subr.mxu0 0.0
        %1160 = vmatpush1.msra.mxu0 0.0
        %1161 = vmatprep.subr.mxu0 0.0
        %1162 = vmatpush1.msra.mxu0 0.0
        %1163 = vmatprep.subr.mxu0 0.0
        %1164 = vmatpush1.msra.mxu0 0.0
        %1165 = vmatprep.subr.mxu0 0.0
        %1166 = vmatpush1.msra.mxu0 0.0
        %1167 = vmatprep.subr.mxu0 0.0
        %1168 = vmatpush1.msra.mxu0 0.0
        %1169 = vmatprep.subr.mxu0 0.0
        %1170 = vmatpush1.msra.mxu0 0.0
        %1171 = vmatprep.subr.mxu0 0.0
        %1172 = vmatpush1.msra.mxu0 0.0
        %1173 = vmatprep.subr.mxu0 0.0
        %1174 = vmatpush1.msra.mxu0 0.0
        %1175 = vmatprep.subr.mxu0 0.0
        %1176 = vmatpush1.msra.mxu0 0.0
        %1177 = vmatprep.subr.mxu0 0.0
        %1178 = vmatpush1.msra.mxu0 0.0
        %1179 = vmatprep.subr.mxu0 0.0
        %1180 = vmatpush1.msra.mxu0 0.0
        %1181 = vmatprep.subr.mxu0 0.0
        %1182 = vmatpush1.msra.mxu0 0.0
        %1183 = vmatprep.subr.mxu0 0.0
        %1184 = vmatpush1.msra.mxu0 0.0
        %1185 = vmatprep.subr.mxu0 0.0
        %1186 = vmatpush1.msra.mxu0 0.0
        %1187 = vmatprep.subr.mxu0 0.0
        %1188 = vmatpush1.msra.mxu0 0.0
        %1189 = vmatprep.subr.mxu0 0.0
        %1190 = vmatpush1.msra.mxu0 0.0
        %1191 = vmatprep.subr.mxu0 0.0
        %1192 = vmatpush1.msra.mxu0 0.0
        %1193 = vmatprep.subr.mxu0 0.0
        %1194 = vmatpush1.msra.mxu0 0.0
        %1195 = vmatprep.subr.mxu0 0.0
        %1196 = vmatpush1.msra.mxu0 0.0
        %1197 = vmatprep.subr.mxu0 0.0
        %1198 = vmatpush1.msra.mxu0 0.0
        %1199 = vmatprep.subr.mxu0 0.0
        %1200 = vmatpush1.msra.mxu0 0.0
        %1201 = vmatprep.subr.mxu0 0.0
        %1202 = vmatpush1.msra.mxu0 0.0
        %1203 = vmatprep.subr.mxu0 0.0
        %1204 = vmatpush1.msra.mxu0 0.0
        %1205 = vmatprep.subr.mxu0 0.0
        %1206 = vmatpush1.msra.mxu0 0.0
        %1207 = vmatprep.subr.mxu0 0.0
        %1208 = vmatpush1.msra.mxu0 0.0
        %1209 = vmatprep.subr.mxu0 0.0
        %1210 = vmatpush1.msra.mxu0 0.0
        %1211 = vmatprep.subr.mxu0 0.0
        %1212 = vmatpush1.msra.mxu0 0.0
        %1213 = vmatprep.subr.mxu0 0.0
        %1214 = vmatpush1.msra.mxu0 0.0
        %1215 = vmatprep.subr.mxu0 0.0
        %1216 = vmatpush1.msra.mxu0 0.0
        %1217 = vmatprep.subr.mxu0 0.0
        %1218 = vmatpush1.msra.mxu0 0.0
        %1219 = vmatprep.mubr.f32.mxu0 0.0
        %v1220 = vand.u32 %v778, 4294901760
        %1221 = vmatmul.mubr.f32.gmra.mrb[0].mxu0 %v1220
        %v1222 = vpop.f32.mrb[0].mxu0
        %v1223 = vadd.f32 %v1151, %v1222
        %v1224 = vpop.f32.mrb[0].mxu0
        %1225 = vdwg.mxu0
        %v1226 = vmul.f32 %v772, 5.656854
        %v1227 = vadd.f32 %v1226, %v1223
        %vm1228 = vcmask 261120
        %1229 = vst.msk [vmem:[%s201] sm:$0xff] %vm1228, %v1227
        %s1230 = sand.u32 %s120, 1
        %s1231 = scalar_lea.sflag [#allocation3], %s1230
        %s1232 = sand.u32 %s120, 1
        %s1233 = smul.addr %s1232, 8
        %s1234 = scalar_lea.vmem [#allocation2], %s1233
        // Predicated region
        $region37: #{tpu_custom_call.1} parent=35 // pred_check
          %p1235 = pneg %p130
        $region38: #{tpu_custom_call.1} parent=35 // pred_check_branch
          %1237 = sbr.rel (%p1235) target = $region40
        $region39: #{tpu_custom_call.1} parent=35 // pred_region
          %s1239 = ssub.s32 128, 128
          %1240 = vsyncadd %s1231, %s1239
          %s1241 = smul.addr %s18, 128
          %s1242 = scalar_lea.hbm %s4, %s1241
          %s1244 = sshll.u32 %s1234, 4
          %s1245 = int_to_ptr.vmem [resolvable:$true] %s1244
          %1247 = dma.vmem_to_hbm [thread:$0]  %s1245, 128, %s1242, %s1231
        $region40: #{tpu_custom_call.1} parent=35 // pred_fallthru
          _
      $region36: #{tpu_custom_call.1} parent=5 // pred_fallthru
        _
      %p1248 = scmp.le.s32.totalorder 2, %s13
      // Predicated region
      $region41: #{tpu_custom_call.1} parent=5 // pred_check
        %p1249 = pneg %p1248
      $region42: #{tpu_custom_call.1} parent=5 // pred_check_branch
        %1251 = sbr.rel (%p1249) target = $region44
      $region43: #{tpu_custom_call.1} parent=5 // pred_region
        %s1252 = ssub.s32 %s13, 2
        // Predicated region
        $region45: #{tpu_custom_call.1} parent=43 // pred_check
          %p1253 = pneg %p136
        $region46: #{tpu_custom_call.1} parent=43 // pred_check_branch
          %1255 = sbr.rel (%p1253) target = $region48
        $region47: #{tpu_custom_call.1} parent=43 // pred_region
          %s1256 = sand.u32 %s121, 1
          %s1257 = scalar_lea.sflag [#allocation3], %s1256
          %s1258 = sand.u32 %s121, 1
          %s1259 = smul.addr %s1258, 8
          %s1260 = scalar_lea.vmem [#allocation2], %s1259
          %1261 = dma.done %s1257, 128
        $region48: #{tpu_custom_call.1} parent=43 // pred_fallthru
          _
      $region44: #{tpu_custom_call.1} parent=5 // pred_fallthru
        _
    $region6: #{tpu_custom_call.1} parent=1 // loop_footer
      %s17 = sadd.s32 1, %s13
    $region7: #{tpu_custom_call.1} parent=1 // loop_footer_branch
      %12 = sbr.rel target = $region3
    $region8: #{tpu_custom_call.1} parent=1 // loop_exit
      _
    %1262 = vsyncpa [#allocation3], 1
    %s1263 = scalar_lea.sflag [#allocation3], 1
    %1264 = vsyncpa %s1263, 1

</llo_original>
